<compile_context>
chip_gen: v6e
topology: v6e:2x2x1
jax: 0.10.0
libtpu: 0.0.40
codegen_flags: <defaults>
</compile_context>

<pallas_src>
import functools
import sys

import jax
import jax.numpy as jnp
from jax.experimental import pallas as pl
from jax.experimental.pallas import tpu as pltpu

_MIB = 1024 * 1024


def _round_up(x: int, m: int) -> int:
    return ((x + m - 1) // m) * m


def _vmem_capacity_bytes() -> int:
    try:
        return int(pltpu.get_tpu_info().vmem_capacity_bytes)
    except Exception:
        # Conservative fallback (v7x-sized) if the query is unavailable.
        return 64 * _MIB


def _adapter_pgn_bert_output_kernel(
    h_ref,       # (tm, I)   output of previous sublayer (pre-dense), compute dtype
    x_ref,       # (tm, H)   input_tensor (residual branch), original dtype
    wd_ref,      # (I, H)    dense weight (pre-transposed to in x out)
    wdown_ref,   # (H, Bn)   PGN-generated adapter down-projection (Bn lane-padded)
    bdown_ref,   # (1, Bn)   folded bias: b_dense @ W_down + b_down   (f32)
    wup_ref,     # (Bn, H)   PGN-generated adapter up-projection
    bout_ref,    # (1, H)    folded bias: b_dense + b_up              (f32)
    gamma_ref,   # (1, H)    LayerNorm weight (f32)
    beta_ref,    # (1, H)    LayerNorm bias (f32)
    o_ref,       # (tm, H)
    *,
    ln_eps: float,
):
    # base.dense (bias folded into bdown/bout): matmul in storage dtype, f32 accumulation.
    a = jnp.dot(h_ref[...], wd_ref[...], preferred_element_type=jnp.float32)

    # base.dropout: identity (inference).

    # PGN adapter: a + W_up @ relu(W_down @ a + b_down_eff) + b_out_eff
    down = jnp.dot(a.astype(wdown_ref.dtype), wdown_ref[...],
                   preferred_element_type=jnp.float32)
    down = jnp.maximum(down + bdown_ref[...].astype(jnp.float32), 0.0)
    up = jnp.dot(down.astype(wup_ref.dtype), wup_ref[...],
                 preferred_element_type=jnp.float32)
    hs = a + up + bout_ref[...].astype(jnp.float32)

    # base.LayerNorm(hidden_states + input_tensor) -- f32, single-pass statistics.
    y = hs + x_ref[...].astype(jnp.float32)
    mean = jnp.mean(y, axis=-1, keepdims=True)
    mean_sq = jnp.mean(y * y, axis=-1, keepdims=True)
    var = jnp.maximum(mean_sq - mean * mean, 0.0)
    inv = jax.lax.rsqrt(var + ln_eps)
    out = (y - mean) * inv * gamma_ref[...].astype(jnp.float32) \
        + beta_ref[...].astype(jnp.float32)
    o_ref[...] = out.astype(o_ref.dtype)


def prepare_adapter_pgn_params(params, lang_emb, *, compute_dtype=jnp.bfloat16,
                               bottleneck_pad: int = 128):
    """One-time (per language) glue, hoisted out of the per-call hot path.

    - Transposes the torch Linear weight (H, I) -> (I, H) once.
    - Runs the PGN weight-generation einsums once.
    - Folds the dense bias into the adapter-down bias and a combined output bias.
    - Zero-pads the adapter bottleneck to a multiple of `bottleneck_pad` lanes
      (128 is right on all generations: the adapter matmuls are a few % of FLOPs,
       so padding to 256 for the wider MXU only adds VPU/VMEM work).
    - Casts matmul weights to `compute_dtype` (default bf16, MXU-native); biases and
      LayerNorm parameters stay f32 for accuracy.
    """
    cast_w = (lambda a: a.astype(compute_dtype)) if compute_dtype is not None else (lambda a: a)

    w_dense = jnp.swapaxes(params["dense_w"], 0, 1).astype(jnp.float32)   # (I, H)
    b_dense = params["dense_b"].astype(jnp.float32)                       # (H,)

    lang_f32 = lang_emb.astype(jnp.float32)
    w_down = jnp.einsum("l,lhb->hb", lang_f32, params["pgn_w_down"].astype(jnp.float32))
    b_down = jnp.einsum("l,lb->b", lang_f32, params["pgn_b_down"].astype(jnp.float32))
    w_up = jnp.einsum("l,lbh->bh", lang_f32, params["pgn_w_up"].astype(jnp.float32))
    b_up = jnp.einsum("l,lh->h", lang_f32, params["pgn_b_up"].astype(jnp.float32))

    # Fold the dense bias:
    #   relu((h@Wd + bd)@Wdn + bdn) == relu(h@Wd@Wdn + (bd@Wdn + bdn))
    #   final bias contribution       == bd + bup
    b_down_eff = jnp.einsum("h,hb->b", b_dense, w_down) + b_down           # (Bn,)
    b_out_eff = b_dense + b_up                                             # (H,)

    bn = w_down.shape[-1]
    bn_pad = _round_up(bn, bottleneck_pad)
    if bn_pad != bn:
        # Padded lanes: 0 weight + 0 bias -> relu(0) = 0 -> contribute nothing via W_up.
        w_down = jnp.pad(w_down, ((0, 0), (0, bn_pad - bn)))
        b_down_eff = jnp.pad(b_down_eff, (0, bn_pad - bn))
        w_up = jnp.pad(w_up, ((0, bn_pad - bn), (0, 0)))

    return {
        "w_dense": cast_w(w_dense),
        "w_down": cast_w(w_down),
        "b_down": b_down_eff.astype(jnp.float32)[None, :],
        "w_up": cast_w(w_up),
        "b_out": b_out_eff.astype(jnp.float32)[None, :],
        "ln_w": params["ln_w"].astype(jnp.float32)[None, :],
        "ln_b": params["ln_b"].astype(jnp.float32)[None, :],
    }


def adapter_pgn_bert_output(
    hidden_states,   # (..., intermediate)
    input_tensor,    # (..., hidden)
    prepared,        # dict from prepare_adapter_pgn_params()
    *,
    tm=None,         # row tile; None = generation/dtype-aware default
    ln_eps: float = 1e-12,
    single_buffer_weights: bool = True,
):
    out_shape_nd = input_tensor.shape
    I = hidden_states.shape[-1]
    H = input_tensor.shape[-1]

    w_dense = prepared["w_dense"]
    w_down = prepared["w_down"]
    b_down = prepared["b_down"]
    w_up = prepared["w_up"]
    b_out = prepared["b_out"]
    gamma = prepared["ln_w"]
    beta = prepared["ln_b"]
    Bn = w_down.shape[-1]

    compute_dtype = w_dense.dtype
    compute_itemsize = jnp.dtype(compute_dtype).itemsize

    # Cast only the MXU operand stream to the compute dtype; the residual stays in its
    # original dtype since it only feeds the f32 LayerNorm path.
    h2d = hidden_states.reshape(-1, I).astype(compute_dtype)
    x2d = input_tensor.reshape(-1, H)
    M = h2d.shape[0]

    # --- generation-aware row tiling + VMEM budget -----------------------------------
    vmem_cap = _vmem_capacity_bytes()
    big_vmem = vmem_cap >= 96 * _MIB            # v5e / v6e (128 MiB) vs v7x (64 MiB)
    row_align = 8 if compute_itemsize >= 4 else 16

    if tm is None:
        if compute_itemsize <= 2:
            tm = 1024 if big_vmem else 512
        else:
            tm = 512 if big_vmem else 256
    tm = _round_up(int(tm), row_align)
    if M <= tm:
        # Keep >= 2 grid steps where alignment allows, so v7x's second TensorCore gets
        # work for small-batch / decode-sized M (free on v5e/v6e).
        tm = max(row_align, _round_up(pl.cdiv(M, 2), row_align))
    grid_m = pl.cdiv(M, tm)   # ragged last tile handled by Pallas boundary masking

    def _nbytes(a):
        return int(a.size) * a.dtype.itemsize

    weight_bytes = sum(_nbytes(a) for a in (w_dense, w_down, b_down, w_up, b_out, gamma, beta))
    x_itemsize = jnp.dtype(x2d.dtype).itemsize
    out_itemsize = jnp.dtype(input_tensor.dtype).itemsize
    act_bytes = 2 * tm * (I * compute_itemsize + H * x_itemsize + H * out_itemsize)
    scratch_bytes = 4 * tm * (3 * H + Bn)       # rough f32 temporaries (a, y, down)
    vmem_est = weight_bytes * (1 if single_buffer_weights else 2) + act_bytes + scratch_bytes
    vmem_budget = (vmem_cap * 7) // 8           # leave headroom for compiler scratch
    vmem_limit = int(min(max(vmem_est * 3 // 2, 32 * _MIB), vmem_budget))

    cost = pl.CostEstimate(
        flops=int(2 * M * (I * H + 2 * H * Bn) + 10 * M * H),
        transcendentals=int(M),                 # one rsqrt per row
        bytes_accessed=int(M * I * compute_itemsize
                           + M * H * x_itemsize
                           + M * H * out_itemsize
                           + weight_bytes),
    )

    kernel = functools.partial(_adapter_pgn_bert_output_kernel, ln_eps=ln_eps)

    row_spec_h = pl.BlockSpec((tm, I), lambda i: (i, 0))
    row_spec_x = pl.BlockSpec((tm, H), lambda i: (i, 0))
    out_spec = pl.BlockSpec((tm, H), lambda i: (i, 0))

    def _const_spec(shape, single_buffer):
        if single_buffer:
            # Constant blocks (same index every step): single-buffer to save VMEM.
            return pl.BlockSpec(shape, lambda i: (0, 0), pipeline_mode=pl.Buffered(1))
        return pl.BlockSpec(shape, lambda i: (0, 0))

    def _build(single_buffer):
        const = functools.partial(_const_spec, single_buffer=single_buffer)
        return pl.pallas_call(
            kernel,
            out_shape=jax.ShapeDtypeStruct((M, H), input_tensor.dtype),
            grid_spec=pltpu.PrefetchScalarGridSpec(
                num_scalar_prefetch=0,
                grid=(grid_m,),
                in_specs=[
                    row_spec_h,            # hidden_states rows
                    row_spec_x,            # input_tensor rows
                    const((I, H)),         # dense weight
                    const((H, Bn)),        # adapter down weight
                    const((1, Bn)),        # folded down bias
                    const((Bn, H)),        # adapter up weight
                    const((1, H)),         # folded output bias
                    const((1, H)),         # LN gamma
                    const((1, H)),         # LN beta
                ],
                out_specs=out_spec,
            ),
            compiler_params=pltpu.CompilerParams(
                dimension_semantics=("parallel",),
                vmem_limit_bytes=vmem_limit,
            ),
            cost_estimate=cost,
        )

    args = (h2d, x2d, w_dense, w_down, b_down, w_up, b_out, gamma, beta)
    if single_buffer_weights:
        try:
            out2d = _build(True)(*args)
        except (TypeError, ValueError, NotImplementedError, RuntimeError,
                pltpu.LoweringException) as e:
            # Logged (not silent): the fallback doubles the constant-weight VMEM blocks,
            # which matters on v7x's 64 MiB VMEM.
            print(f"[adapter_pgn_bert_output] single-buffered weight blocks unsupported "
                  f"({type(e).__name__}: {e}); falling back to double-buffered constants.",
                  file=sys.stderr)
            out2d = _build(False)(*args)
    else:
        out2d = _build(False)(*args)

    return out2d.reshape(out_shape_nd)


def _reference(hidden_states, input_tensor, params, lang_emb, ln_eps=1e-12):
    w_down = jnp.einsum("l,lhb->hb", lang_emb, params["pgn_w_down"])
    b_down = jnp.einsum("l,lb->b", lang_emb, params["pgn_b_down"])
    w_up = jnp.einsum("l,lbh->bh", lang_emb, params["pgn_w_up"])
    b_up = jnp.einsum("l,lh->h", lang_emb, params["pgn_b_up"])
    hs = hidden_states @ params["dense_w"].T + params["dense_b"]
    down = jnp.maximum(hs @ w_down + b_down, 0.0)
    hs = hs + (down @ w_up + b_up)
    y = hs + input_tensor
    mean = jnp.mean(y, axis=-1, keepdims=True)
    var = jnp.mean((y - mean) ** 2, axis=-1, keepdims=True)
    return (y - mean) * jax.lax.rsqrt(var + ln_eps) * params["ln_w"] + params["ln_b"]


if __name__ == "__main__":
    # Small shapes consistent with a BertOutput-style sublayer.
    B, S = 2, 8
    H = 32            # hidden_size
    I = 64            # intermediate_size (dense: I -> H)
    Bn = 16           # adapter bottleneck (lane-padded inside prepare)
    L = 8             # language-embedding dim

    key = jax.random.PRNGKey(0)
    keys = jax.random.split(key, 11)

    hidden_states = jax.random.normal(keys[0], (B, S, I), dtype=jnp.float32)
    input_tensor = jax.random.normal(keys[1], (B, S, H), dtype=jnp.float32)
    lang_emb = jax.random.normal(keys[2], (L,), dtype=jnp.float32) * 0.5

    params = {
        # base.dense: nn.Linear(I, H) -> weight (H, I), bias (H,)
        "dense_w": jax.random.normal(keys[3], (H, I), dtype=jnp.float32) * 0.05,
        "dense_b": jax.random.normal(keys[4], (H,), dtype=jnp.float32) * 0.05,
        # PGN adapter parameter-generator tensors (contracted with lang_emb)
        "pgn_w_down": jax.random.normal(keys[5], (L, H, Bn), dtype=jnp.float32) * 0.05,
        "pgn_b_down": jax.random.normal(keys[6], (L, Bn), dtype=jnp.float32) * 0.05,
        "pgn_w_up": jax.random.normal(keys[7], (L, Bn, H), dtype=jnp.float32) * 0.05,
        "pgn_b_up": jax.random.normal(keys[8], (L, H), dtype=jnp.float32) * 0.05,
        # base.LayerNorm(H)
        "ln_w": jnp.ones((H,), dtype=jnp.float32)
        + 0.01 * jax.random.normal(keys[9], (H,), dtype=jnp.float32),
        "ln_b": 0.01 * jax.random.normal(keys[10], (H,), dtype=jnp.float32),
    }

    ref = _reference(hidden_states, input_tensor, params, lang_emb)

    # ---- f32 path (near-exact check vs reference; bias folding is the only diff) ---
    prepared_f32 = prepare_adapter_pgn_params(params, lang_emb, compute_dtype=jnp.float32)
    out_f32 = adapter_pgn_bert_output(hidden_states, input_tensor, prepared_f32)
    out_f32 = jax.block_until_ready(out_f32)
    assert out_f32.shape == (B, S, H)
    assert jnp.allclose(out_f32, ref, atol=2e-4, rtol=2e-4), "f32 kernel mismatch vs reference"

    # ---- default bf16 fast path (MXU-native weights, f32 accumulation + f32 LN) ----
    prepared_bf16 = prepare_adapter_pgn_params(params, lang_emb)   # default bf16
    out_bf16 = adapter_pgn_bert_output(hidden_states, input_tensor, prepared_bf16)
    out_bf16 = jax.block_until_ready(out_bf16)
    assert out_bf16.shape == (B, S, H)
    max_err = float(jnp.max(jnp.abs(out_bf16.astype(jnp.float32) - ref)))
    assert max_err < 0.1, f"bf16 kernel deviates too much from reference: {max_err}"

    # ---- ragged-row case (M not a multiple of the tile) exercises boundary masking --
    hs_r = jax.random.normal(keys[5], (1, 9, I), dtype=jnp.float32)
    x_r = jax.random.normal(keys[6], (1, 9, H), dtype=jnp.float32)
    ref_r = _reference(hs_r, x_r, params, lang_emb)
    out_r = adapter_pgn_bert_output(hs_r, x_r, prepared_f32)
    out_r = jax.block_until_ready(out_r)
    assert out_r.shape == (1, 9, H)
    assert jnp.allclose(out_r, ref_r, atol=2e-4, rtol=2e-4), "ragged-tile kernel mismatch"

    print("KERNEL_OK")
</pallas_src>

<mosaic_0001>
module attributes {stable_mosaic.version = 11 : i64} {
  func.func @_adapter_pgn_bert_output_kernel(%arg0: i32, %arg1: memref<8x64xf32, #tpu.memory_space<vmem>>, %arg2: memref<8x32xf32, #tpu.memory_space<vmem>>, %arg3: memref<64x32xf32, #tpu.memory_space<vmem>>, %arg4: memref<32x128xf32, #tpu.memory_space<vmem>>, %arg5: memref<1x128xf32, #tpu.memory_space<vmem>>, %arg6: memref<128x32xf32, #tpu.memory_space<vmem>>, %arg7: memref<1x32xf32, #tpu.memory_space<vmem>>, %arg8: memref<1x32xf32, #tpu.memory_space<vmem>>, %arg9: memref<1x32xf32, #tpu.memory_space<vmem>>, %arg10: memref<8x32xf32, #tpu.memory_space<vmem>>) attributes {dimension_semantics = [#tpu.dimension_semantics<parallel>], iteration_bounds = array<i64: 2>, scalar_prefetch = 0 : i64, scratch_operands = 0 : i64, tpu.core_type = #tpu.core_type<tc>, window_params = [{transform_indices = @transform_0, window_bounds = array<i64: 8, 64>}, {transform_indices = @transform_1, window_bounds = array<i64: 8, 32>}, {pipeline_mode = #tpu.pipeline_mode<synchronous>, transform_indices = @transform_2, window_bounds = array<i64: 64, 32>}, {pipeline_mode = #tpu.pipeline_mode<synchronous>, transform_indices = @transform_3, window_bounds = array<i64: 32, 128>}, {pipeline_mode = #tpu.pipeline_mode<synchronous>, transform_indices = @transform_4, window_bounds = array<i64: 1, 128>}, {pipeline_mode = #tpu.pipeline_mode<synchronous>, transform_indices = @transform_5, window_bounds = array<i64: 128, 32>}, {pipeline_mode = #tpu.pipeline_mode<synchronous>, transform_indices = @transform_6, window_bounds = array<i64: 1, 32>}, {pipeline_mode = #tpu.pipeline_mode<synchronous>, transform_indices = @transform_7, window_bounds = array<i64: 1, 32>}, {pipeline_mode = #tpu.pipeline_mode<synchronous>, transform_indices = @transform_8, window_bounds = array<i64: 1, 32>}, {transform_indices = @transform_9, window_bounds = array<i64: 8, 32>}]} {
    %c0 = arith.constant 0 : index
    %c0_0 = arith.constant 0 : index
    %0 = vector.load %arg1[%c0, %c0_0] : memref<8x64xf32, #tpu.memory_space<vmem>>, vector<8x64xf32>
    %c0_1 = arith.constant 0 : index
    %c0_2 = arith.constant 0 : index
    %1 = vector.load %arg3[%c0_1, %c0_2] : memref<64x32xf32, #tpu.memory_space<vmem>>, vector<64x32xf32>
    %cst = arith.constant dense<0.000000e+00> : vector<8x32xf32>
    %2 = tpu.matmul %0, %1, %cst {dimension_numbers = #tpu.dot_dimension_numbers<[1], [0], [0], [1], [0, 0, 1, 1], [], []>} : vector<8x64xf32>, vector<64x32xf32>, vector<8x32xf32> -> vector<8x32xf32>
    %c0_3 = arith.constant 0 : index
    %c0_4 = arith.constant 0 : index
    %3 = vector.load %arg4[%c0_3, %c0_4] : memref<32x128xf32, #tpu.memory_space<vmem>>, vector<32x128xf32>
    %cst_5 = arith.constant dense<0.000000e+00> : vector<8x128xf32>
    %4 = tpu.matmul %2, %3, %cst_5 {dimension_numbers = #tpu.dot_dimension_numbers<[1], [0], [0], [1], [0, 0, 1, 1], [], []>} : vector<8x32xf32>, vector<32x128xf32>, vector<8x128xf32> -> vector<8x128xf32>
    %c0_6 = arith.constant 0 : index
    %c0_7 = arith.constant 0 : index
    %5 = vector.load %arg5[%c0_6, %c0_7] : memref<1x128xf32, #tpu.memory_space<vmem>>, vector<1x128xf32>
    %6 = vector.broadcast %5 : vector<1x128xf32> to vector<8x128xf32>
    %7 = arith.addf %4, %6 : vector<8x128xf32>
    %cst_8 = arith.constant 0.000000e+00 : f32
    %8 = vector.broadcast %cst_8 : f32 to vector<8x128xf32>
    %9 = arith.maximumf %7, %8 : vector<8x128xf32>
    %c0_9 = arith.constant 0 : index
    %c0_10 = arith.constant 0 : index
    %10 = vector.load %arg6[%c0_9, %c0_10] : memref<128x32xf32, #tpu.memory_space<vmem>>, vector<128x32xf32>
    %cst_11 = arith.constant dense<0.000000e+00> : vector<8x32xf32>
    %11 = tpu.matmul %9, %10, %cst_11 {dimension_numbers = #tpu.dot_dimension_numbers<[1], [0], [0], [1], [0, 0, 1, 1], [], []>} : vector<8x128xf32>, vector<128x32xf32>, vector<8x32xf32> -> vector<8x32xf32>
    %12 = arith.addf %2, %11 : vector<8x32xf32>
    %c0_12 = arith.constant 0 : index
    %c0_13 = arith.constant 0 : index
    %13 = vector.load %arg7[%c0_12, %c0_13] : memref<1x32xf32, #tpu.memory_space<vmem>>, vector<1x32xf32>
    %14 = vector.broadcast %13 : vector<1x32xf32> to vector<8x32xf32>
    %15 = arith.addf %12, %14 : vector<8x32xf32>
    %c0_14 = arith.constant 0 : index
    %c0_15 = arith.constant 0 : index
    %16 = vector.load %arg2[%c0_14, %c0_15] : memref<8x32xf32, #tpu.memory_space<vmem>>, vector<8x32xf32>
    %17 = arith.addf %15, %16 : vector<8x32xf32>
    %cst_16 = arith.constant dense<0.000000e+00> : vector<8xf32>
    %18 = vector.multi_reduction <add>, %17, %cst_16 [1] : vector<8x32xf32> to vector<8xf32>
    %19 = vector.shape_cast %18 : vector<8xf32> to vector<8x1xf32>
    %cst_17 = arith.constant 3.200000e+01 : f32
    %20 = vector.broadcast %cst_17 : f32 to vector<8x1xf32>
    %21 = arith.divf %19, %20 : vector<8x1xf32>
    %22 = arith.mulf %17, %17 : vector<8x32xf32>
    %cst_18 = arith.constant dense<0.000000e+00> : vector<8xf32>
    %23 = vector.multi_reduction <add>, %22, %cst_18 [1] : vector<8x32xf32> to vector<8xf32>
    %24 = vector.shape_cast %23 : vector<8xf32> to vector<8x1xf32>
    %cst_19 = arith.constant 3.200000e+01 : f32
    %25 = vector.broadcast %cst_19 : f32 to vector<8x1xf32>
    %26 = arith.divf %24, %25 : vector<8x1xf32>
    %27 = arith.mulf %21, %21 : vector<8x1xf32>
    %28 = arith.subf %26, %27 : vector<8x1xf32>
    %cst_20 = arith.constant 0.000000e+00 : f32
    %29 = vector.broadcast %cst_20 : f32 to vector<8x1xf32>
    %30 = arith.maximumf %28, %29 : vector<8x1xf32>
    %cst_21 = arith.constant 9.99999996E-13 : f32
    %31 = vector.broadcast %cst_21 : f32 to vector<8x1xf32>
    %32 = arith.addf %30, %31 : vector<8x1xf32>
    %33 = math.rsqrt %32 : vector<8x1xf32>
    %34 = vector.broadcast %21 : vector<8x1xf32> to vector<8x32xf32>
    %35 = arith.subf %17, %34 : vector<8x32xf32>
    %36 = vector.broadcast %33 : vector<8x1xf32> to vector<8x32xf32>
    %37 = arith.mulf %35, %36 : vector<8x32xf32>
    %c0_22 = arith.constant 0 : index
    %c0_23 = arith.constant 0 : index
    %38 = vector.load %arg8[%c0_22, %c0_23] : memref<1x32xf32, #tpu.memory_space<vmem>>, vector<1x32xf32>
    %39 = vector.broadcast %38 : vector<1x32xf32> to vector<8x32xf32>
    %40 = arith.mulf %37, %39 : vector<8x32xf32>
    %c0_24 = arith.constant 0 : index
    %c0_25 = arith.constant 0 : index
    %41 = vector.load %arg9[%c0_24, %c0_25] : memref<1x32xf32, #tpu.memory_space<vmem>>, vector<1x32xf32>
    %42 = vector.broadcast %41 : vector<1x32xf32> to vector<8x32xf32>
    %43 = arith.addf %40, %42 : vector<8x32xf32>
    %c0_26 = arith.constant 0 : index
    %c0_27 = arith.constant 0 : index
    %44 = vector.load %arg10[%c0_26, %c0_27] : memref<8x32xf32, #tpu.memory_space<vmem>>, vector<8x32xf32>
    tpu.vector_store %arg10[%c0_26, %c0_27], %43 {strides = array<i32>} : memref<8x32xf32, #tpu.memory_space<vmem>>, vector<8x32xf32>,
    return
  }
  func.func @transform_0(%arg0: i32) -> (i32, i32) {
    %c0_i32 = arith.constant 0 : i32
    %c0_i32_0 = arith.constant 0 : i32
    return %arg0, %c0_i32 : i32, i32
  }
  func.func @transform_1(%arg0: i32) -> (i32, i32) {
    %c0_i32 = arith.constant 0 : i32
    %c0_i32_0 = arith.constant 0 : i32
    return %arg0, %c0_i32 : i32, i32
  }
  func.func @transform_2(%arg0: i32) -> (i32, i32) {
    %c0_i32 = arith.constant 0 : i32
    %c0_i32_0 = arith.constant 0 : i32
    %c0_i32_1 = arith.constant 0 : i32
    return %c0_i32, %c0_i32_0 : i32, i32
  }
  func.func @transform_3(%arg0: i32) -> (i32, i32) {
    %c0_i32 = arith.constant 0 : i32
    %c0_i32_0 = arith.constant 0 : i32
    %c0_i32_1 = arith.constant 0 : i32
    return %c0_i32, %c0_i32_0 : i32, i32
  }
  func.func @transform_4(%arg0: i32) -> (i32, i32) {
    %c0_i32 = arith.constant 0 : i32
    %c0_i32_0 = arith.constant 0 : i32
    %c0_i32_1 = arith.constant 0 : i32
    return %c0_i32, %c0_i32_0 : i32, i32
  }
  func.func @transform_5(%arg0: i32) -> (i32, i32) {
    %c0_i32 = arith.constant 0 : i32
    %c0_i32_0 = arith.constant 0 : i32
    %c0_i32_1 = arith.constant 0 : i32
    return %c0_i32, %c0_i32_0 : i32, i32
  }
  func.func @transform_6(%arg0: i32) -> (i32, i32) {
    %c0_i32 = arith.constant 0 : i32
    %c0_i32_0 = arith.constant 0 : i32
    %c0_i32_1 = arith.constant 0 : i32
    return %c0_i32, %c0_i32_0 : i32, i32
  }
  func.func @transform_7(%arg0: i32) -> (i32, i32) {
    %c0_i32 = arith.constant 0 : i32
    %c0_i32_0 = arith.constant 0 : i32
    %c0_i32_1 = arith.constant 0 : i32
    return %c0_i32, %c0_i32_0 : i32, i32
  }
  func.func @transform_8(%arg0: i32) -> (i32, i32) {
    %c0_i32 = arith.constant 0 : i32
    %c0_i32_0 = arith.constant 0 : i32
    %c0_i32_1 = arith.constant 0 : i32
    return %c0_i32, %c0_i32_0 : i32, i32
  }
  func.func @transform_9(%arg0: i32) -> (i32, i32) {
    %c0_i32 = arith.constant 0 : i32
    %c0_i32_0 = arith.constant 0 : i32
    return %arg0, %c0_i32 : i32, i32
  }
}

</mosaic_0001>

<llo_original>
// kernel: tpu_custom_call.1
$region0: #{tpu_custom_call.1}
  #allocation0 [shape = 'u32[]', space=smem, size = 0x4, offset = 0x4, fixed_abs, tag = 'smem constant byte address 0x4 - core index']
  #allocation1 [shape = 'u32[144,128]{1,0:T(1,128)}', space=vmem, size = 0x12000, scoped, tag = 'internal scratch']
  %s0 = inlined_call_operand.vmem [shape: f32[16,64], index: 0, kind: input, shape index: {}]
  %s1 = inlined_call_operand.vmem [shape: f32[16,32], index: 1, kind: input, shape index: {}]
  %s2 = inlined_call_operand.vmem [shape: f32[64,32], index: 2, kind: input, shape index: {}]
  %s3 = inlined_call_operand.vmem [shape: f32[32,128], index: 3, kind: input, shape index: {}]
  %s4 = inlined_call_operand.vmem [shape: f32[1,128], index: 4, kind: input, shape index: {}]
  %s5 = inlined_call_operand.vmem [shape: f32[128,32], index: 5, kind: input, shape index: {}]
  %s6 = inlined_call_operand.vmem [shape: f32[1,32], index: 6, kind: input, shape index: {}]
  %s7 = inlined_call_operand.vmem [shape: f32[1,32], index: 7, kind: input, shape index: {}]
  %s8 = inlined_call_operand.vmem [shape: f32[1,32], index: 8, kind: input, shape index: {}]
  %s9 = inlined_call_operand.hbm [shape: f32[16,32], index: 9, kind: output, shape index: {}]
  %s10 = sld [smem:[#allocation0]]
  $region69: #{tpu_custom_call.1} parent=0
    _
  %s12 = ssub.s32 1, %s10
  %s13 = scalar_select 0, %s12, %s10
  $region1: #{tpu_custom_call.1} parent=0
    #allocation2 [shape = 'u8[8192]{0}', space=vmem, size = 0x2000, scoped, tag = 'output window, operand 0']
    #allocation3 [shape = 's32[2]{0}', space=sflag, size = 0x8, scoped, tag = 'scoped memory for tpu_custom_call.1']
    %14 = vsyncpa [#allocation3], 0
    %s15 = scalar_lea.sflag [#allocation3], 1
    %16 = vsyncpa %s15, 0
    loop: start=0, step=1, limit=4
    $region2: #{tpu_custom_call.1} parent=1 // loop_pre_header
      _
    $region3: #{tpu_custom_call.1} parent=1 // loop_header
      %s18 = sphi 0, %s22
      %p19 = scmp.ge.s32.totalorder %s18, 4
      %s28 = sphi 0, %s30
      %s31 = sphi 0, %s28
      %s32 = sphi 0, %s31
      %s48 = sphi 0, %s32
      %s54 = sphi 0, %s56
      %s57 = sphi 0, %s54
      %s58 = sphi 0, %s57
      %s74 = sphi 0, %s58
      %s78 = sphi 0, %s78
      %s80 = sphi 0, %s78
      %s81 = sphi 0, %s80
      %s95 = sphi 0, %s81
      %s99 = sphi 0, %s99
      %s101 = sphi 0, %s99
      %s102 = sphi 0, %s101
      %s116 = sphi 0, %s102
      %s120 = sphi 0, %s120
      %s122 = sphi 0, %s120
      %s123 = sphi 0, %s122
      %s137 = sphi 0, %s123
      %s141 = sphi 0, %s141
      %s143 = sphi 0, %s141
      %s144 = sphi 0, %s143
      %s158 = sphi 0, %s144
      %s162 = sphi 0, %s162
      %s164 = sphi 0, %s162
      %s165 = sphi 0, %s164
      %s179 = sphi 0, %s165
      %s183 = sphi 0, %s183
      %s185 = sphi 0, %s183
      %s186 = sphi 0, %s185
      %s200 = sphi 0, %s186
      %s204 = sphi 0, %s204
      %s206 = sphi 0, %s204
      %s207 = sphi 0, %s206
      %s221 = sphi 0, %s207
      %s227 = sphi 0, %s229
      %s230 = sphi 0, %s227
      %s231 = sphi 0, %s230
      %s247 = sphi 0, %s231
    $region4: #{tpu_custom_call.1} parent=1 // loop_header_branch
      %21 = sbr.rel (%p19) target = $region8
    $region5: #{tpu_custom_call.1} parent=1 // loop_body
      %s23 = ssub.s32 %s18, 1
      %s24 = ssub.s32 %s18, 2
      %s25 = sadd.s32 %s18, 1
      %s26 = ssub.s32 %s18, %s25
      %p27 = scmp.eq.s32.totalorder %s26, 0
      %s29 = sadd.s32 %s28, 1
      %s30 = scalar_select %p27, %s28, %s29
      %p33 = pneg %p27
      %p34 = scmp.eq.s32.totalorder %s18, 1
      %p35 = por %p33, %p34
      %p36 = scmp.ne.s32.totalorder %s28, %s31
      %p37 = scmp.eq.s32.totalorder %s18, 0
      %p38 = por %p36, %p37
      %p39 = scmp.ne.s32.totalorder %s28, %s31
      %p40 = scmp.eq.s32.totalorder %s23, 1
      %p41 = por %p39, %p40
      %p42 = scmp.ne.s32.totalorder %s31, %s32
      %p43 = scmp.eq.s32.totalorder %s23, 0
      %p44 = por %p42, %p43
      %p45 = scmp.ne.s32.totalorder %s31, %s32
      %p46 = scmp.eq.s32.totalorder %s24, 1
      %p47 = por %p45, %p46
      %p49 = scmp.ne.s32.totalorder %s32, %s48
      %p50 = scmp.eq.s32.totalorder %s24, 0
      %p51 = por %p49, %p50
      %s52 = ssub.s32 %s18, %s25
      %p53 = scmp.eq.s32.totalorder %s52, 0
      %s55 = sadd.s32 %s54, 1
      %s56 = scalar_select %p53, %s54, %s55
      %p59 = pneg %p53
      %p60 = scmp.eq.s32.totalorder %s18, 1
      %p61 = por %p59, %p60
      %p62 = scmp.ne.s32.totalorder %s54, %s57
      %p63 = scmp.eq.s32.totalorder %s18, 0
      %p64 = por %p62, %p63
      %p65 = scmp.ne.s32.totalorder %s54, %s57
      %p66 = scmp.eq.s32.totalorder %s23, 1
      %p67 = por %p65, %p66
      %p68 = scmp.ne.s32.totalorder %s57, %s58
      %p69 = scmp.eq.s32.totalorder %s23, 0
      %p70 = por %p68, %p69
      %p71 = scmp.ne.s32.totalorder %s57, %s58
      %p72 = scmp.eq.s32.totalorder %s24, 1
      %p73 = por %p71, %p72
      %p75 = scmp.ne.s32.totalorder %s58, %s74
      %p76 = scmp.eq.s32.totalorder %s24, 0
      %p77 = por %p75, %p76
      %s79 = sadd.s32 %s78, 1
      %p82 = scmp.eq.s32.totalorder %s18, 1
      %p83 = scmp.ne.s32.totalorder %s78, %s80
      %p84 = scmp.eq.s32.totalorder %s18, 0
      %p85 = por %p83, %p84
      %p86 = scmp.ne.s32.totalorder %s78, %s80
      %p87 = scmp.eq.s32.totalorder %s23, 1
      %p88 = por %p86, %p87
      %p89 = scmp.ne.s32.totalorder %s80, %s81
      %p90 = scmp.eq.s32.totalorder %s23, 0
      %p91 = por %p89, %p90
      %p92 = scmp.ne.s32.totalorder %s80, %s81
      %p93 = scmp.eq.s32.totalorder %s24, 1
      %p94 = por %p92, %p93
      %p96 = scmp.ne.s32.totalorder %s81, %s95
      %p97 = scmp.eq.s32.totalorder %s24, 0
      %p98 = por %p96, %p97
      %s100 = sadd.s32 %s99, 1
      %p103 = scmp.eq.s32.totalorder %s18, 1
      %p104 = scmp.ne.s32.totalorder %s99, %s101
      %p105 = scmp.eq.s32.totalorder %s18, 0
      %p106 = por %p104, %p105
      %p107 = scmp.ne.s32.totalorder %s99, %s101
      %p108 = scmp.eq.s32.totalorder %s23, 1
      %p109 = por %p107, %p108
      %p110 = scmp.ne.s32.totalorder %s101, %s102
      %p111 = scmp.eq.s32.totalorder %s23, 0
      %p112 = por %p110, %p111
      %p113 = scmp.ne.s32.totalorder %s101, %s102
      %p114 = scmp.eq.s32.totalorder %s24, 1
      %p115 = por %p113, %p114
      %p117 = scmp.ne.s32.totalorder %s102, %s116
      %p118 = scmp.eq.s32.totalorder %s24, 0
      %p119 = por %p117, %p118
      %s121 = sadd.s32 %s120, 1
      %p124 = scmp.eq.s32.totalorder %s18, 1
      %p125 = scmp.ne.s32.totalorder %s120, %s122
      %p126 = scmp.eq.s32.totalorder %s18, 0
      %p127 = por %p125, %p126
      %p128 = scmp.ne.s32.totalorder %s120, %s122
      %p129 = scmp.eq.s32.totalorder %s23, 1
      %p130 = por %p128, %p129
      %p131 = scmp.ne.s32.totalorder %s122, %s123
      %p132 = scmp.eq.s32.totalorder %s23, 0
      %p133 = por %p131, %p132
      %p134 = scmp.ne.s32.totalorder %s122, %s123
      %p135 = scmp.eq.s32.totalorder %s24, 1
      %p136 = por %p134, %p135
      %p138 = scmp.ne.s32.totalorder %s123, %s137
      %p139 = scmp.eq.s32.totalorder %s24, 0
      %p140 = por %p138, %p139
      %s142 = sadd.s32 %s141, 1
      %p145 = scmp.eq.s32.totalorder %s18, 1
      %p146 = scmp.ne.s32.totalorder %s141, %s143
      %p147 = scmp.eq.s32.totalorder %s18, 0
      %p148 = por %p146, %p147
      %p149 = scmp.ne.s32.totalorder %s141, %s143
      %p150 = scmp.eq.s32.totalorder %s23, 1
      %p151 = por %p149, %p150
      %p152 = scmp.ne.s32.totalorder %s143, %s144
      %p153 = scmp.eq.s32.totalorder %s23, 0
      %p154 = por %p152, %p153
      %p155 = scmp.ne.s32.totalorder %s143, %s144
      %p156 = scmp.eq.s32.totalorder %s24, 1
      %p157 = por %p155, %p156
      %p159 = scmp.ne.s32.totalorder %s144, %s158
      %p160 = scmp.eq.s32.totalorder %s24, 0
      %p161 = por %p159, %p160
      %s163 = sadd.s32 %s162, 1
      %p166 = scmp.eq.s32.totalorder %s18, 1
      %p167 = scmp.ne.s32.totalorder %s162, %s164
      %p168 = scmp.eq.s32.totalorder %s18, 0
      %p169 = por %p167, %p168
      %p170 = scmp.ne.s32.totalorder %s162, %s164
      %p171 = scmp.eq.s32.totalorder %s23, 1
      %p172 = por %p170, %p171
      %p173 = scmp.ne.s32.totalorder %s164, %s165
      %p174 = scmp.eq.s32.totalorder %s23, 0
      %p175 = por %p173, %p174
      %p176 = scmp.ne.s32.totalorder %s164, %s165
      %p177 = scmp.eq.s32.totalorder %s24, 1
      %p178 = por %p176, %p177
      %p180 = scmp.ne.s32.totalorder %s165, %s179
      %p181 = scmp.eq.s32.totalorder %s24, 0
      %p182 = por %p180, %p181
      %s184 = sadd.s32 %s183, 1
      %p187 = scmp.eq.s32.totalorder %s18, 1
      %p188 = scmp.ne.s32.totalorder %s183, %s185
      %p189 = scmp.eq.s32.totalorder %s18, 0
      %p190 = por %p188, %p189
      %p191 = scmp.ne.s32.totalorder %s183, %s185
      %p192 = scmp.eq.s32.totalorder %s23, 1
      %p193 = por %p191, %p192
      %p194 = scmp.ne.s32.totalorder %s185, %s186
      %p195 = scmp.eq.s32.totalorder %s23, 0
      %p196 = por %p194, %p195
      %p197 = scmp.ne.s32.totalorder %s185, %s186
      %p198 = scmp.eq.s32.totalorder %s24, 1
      %p199 = por %p197, %p198
      %p201 = scmp.ne.s32.totalorder %s186, %s200
      %p202 = scmp.eq.s32.totalorder %s24, 0
      %p203 = por %p201, %p202
      %s205 = sadd.s32 %s204, 1
      %p208 = scmp.eq.s32.totalorder %s18, 1
      %p209 = scmp.ne.s32.totalorder %s204, %s206
      %p210 = scmp.eq.s32.totalorder %s18, 0
      %p211 = por %p209, %p210
      %p212 = scmp.ne.s32.totalorder %s204, %s206
      %p213 = scmp.eq.s32.totalorder %s23, 1
      %p214 = por %p212, %p213
      %p215 = scmp.ne.s32.totalorder %s206, %s207
      %p216 = scmp.eq.s32.totalorder %s23, 0
      %p217 = por %p215, %p216
      %p218 = scmp.ne.s32.totalorder %s206, %s207
      %p219 = scmp.eq.s32.totalorder %s24, 1
      %p220 = por %p218, %p219
      %p222 = scmp.ne.s32.totalorder %s207, %s221
      %p223 = scmp.eq.s32.totalorder %s24, 0
      %p224 = por %p222, %p223
      %s225 = ssub.s32 %s18, %s25
      %p226 = scmp.eq.s32.totalorder %s225, 0
      %s228 = sadd.s32 %s227, 1
      %s229 = scalar_select %p226, %s227, %s228
      %p232 = pneg %p226
      %p233 = scmp.eq.s32.totalorder %s18, 1
      %p234 = por %p232, %p233
      %p235 = scmp.ne.s32.totalorder %s227, %s230
      %p236 = scmp.eq.s32.totalorder %s18, 0
      %p237 = por %p235, %p236
      %p238 = scmp.ne.s32.totalorder %s227, %s230
      %p239 = scmp.eq.s32.totalorder %s23, 1
      %p240 = por %p238, %p239
      %p241 = scmp.ne.s32.totalorder %s230, %s231
      %p242 = scmp.eq.s32.totalorder %s23, 0
      %p243 = por %p241, %p242
      %p244 = scmp.ne.s32.totalorder %s230, %s231
      %p245 = scmp.eq.s32.totalorder %s24, 1
      %p246 = por %p244, %p245
      %p248 = scmp.ne.s32.totalorder %s231, %s247
      %p249 = scmp.eq.s32.totalorder %s24, 0
      %p250 = por %p248, %p249
      %p251 = scmp.le.s32.totalorder 1, %s18
      %p252 = scmp.lt.s32.totalorder %s18, 3
      %p253 = pnand %p251, %p252
      %p254 = pneg %p253
      // Predicated region
      $region9: #{tpu_custom_call.1} parent=5 // pred_check
        _
      $region10: #{tpu_custom_call.1} parent=5 // pred_check_branch
        %256 = sbr.rel (%p253) target = $region12
      $region11: #{tpu_custom_call.1} parent=5 // pred_region
        %s257 = ssub.s32 %s18, 1
        // Predicated region
        $region13: #{tpu_custom_call.1} parent=11 // pred_check
          %p258 = pneg %p91
        $region14: #{tpu_custom_call.1} parent=11 // pred_check_branch
          %260 = sbr.rel (%p258) target = $region16
        $region15: #{tpu_custom_call.1} parent=11 // pred_region
          _
        $region16: #{tpu_custom_call.1} parent=11 // pred_fallthru
          _
        // Predicated region
        $region17: #{tpu_custom_call.1} parent=11 // pred_check
          %p261 = pneg %p112
        $region18: #{tpu_custom_call.1} parent=11 // pred_check_branch
          %263 = sbr.rel (%p261) target = $region20
        $region19: #{tpu_custom_call.1} parent=11 // pred_region
          _
        $region20: #{tpu_custom_call.1} parent=11 // pred_fallthru
          _
        // Predicated region
        $region21: #{tpu_custom_call.1} parent=11 // pred_check
          %p264 = pneg %p133
        $region22: #{tpu_custom_call.1} parent=11 // pred_check_branch
          %266 = sbr.rel (%p264) target = $region24
        $region23: #{tpu_custom_call.1} parent=11 // pred_region
          _
        $region24: #{tpu_custom_call.1} parent=11 // pred_fallthru
          _
        // Predicated region
        $region25: #{tpu_custom_call.1} parent=11 // pred_check
          %p267 = pneg %p154
        $region26: #{tpu_custom_call.1} parent=11 // pred_check_branch
          %269 = sbr.rel (%p267) target = $region28
        $region27: #{tpu_custom_call.1} parent=11 // pred_region
          _
        $region28: #{tpu_custom_call.1} parent=11 // pred_fallthru
          _
        // Predicated region
        $region29: #{tpu_custom_call.1} parent=11 // pred_check
          %p270 = pneg %p175
        $region30: #{tpu_custom_call.1} parent=11 // pred_check_branch
          %272 = sbr.rel (%p270) target = $region32
        $region31: #{tpu_custom_call.1} parent=11 // pred_region
          _
        $region32: #{tpu_custom_call.1} parent=11 // pred_fallthru
          _
        // Predicated region
        $region33: #{tpu_custom_call.1} parent=11 // pred_check
          %p273 = pneg %p196
        $region34: #{tpu_custom_call.1} parent=11 // pred_check_branch
          %275 = sbr.rel (%p273) target = $region36
        $region35: #{tpu_custom_call.1} parent=11 // pred_region
          _
        $region36: #{tpu_custom_call.1} parent=11 // pred_fallthru
          _
        // Predicated region
        $region37: #{tpu_custom_call.1} parent=11 // pred_check
          %p276 = pneg %p217
        $region38: #{tpu_custom_call.1} parent=11 // pred_check_branch
          %278 = sbr.rel (%p276) target = $region40
        $region39: #{tpu_custom_call.1} parent=11 // pred_region
          _
        $region40: #{tpu_custom_call.1} parent=11 // pred_fallthru
          _
      $region12: #{tpu_custom_call.1} parent=5 // pred_fallthru
        _
      %p279 = scmp.lt.s32.totalorder %s18, 2
      // Predicated region
      $region41: #{tpu_custom_call.1} parent=5 // pred_check
        %p280 = pneg %p279
      $region42: #{tpu_custom_call.1} parent=5 // pred_check_branch
        %282 = sbr.rel (%p280) target = $region44
      $region43: #{tpu_custom_call.1} parent=5 // pred_region
        // Predicated region
        $region45: #{tpu_custom_call.1} parent=43 // pred_check
          %p283 = pneg %p38
        $region46: #{tpu_custom_call.1} parent=43 // pred_check_branch
          %285 = sbr.rel (%p283) target = $region48
        $region47: #{tpu_custom_call.1} parent=43 // pred_region
          %p286 = scmp.lt.s32.totalorder %s18, 1
          %s287 = scalar_select %p286, %s18, 1
          %s288 = smul.addr %s287, 8
          %s289 = scalar_lea.vmem %s0, %s288
        $region48: #{tpu_custom_call.1} parent=43 // pred_fallthru
          _
        // Predicated region
        $region49: #{tpu_custom_call.1} parent=43 // pred_check
          %p290 = pneg %p64
        $region50: #{tpu_custom_call.1} parent=43 // pred_check_branch
          %292 = sbr.rel (%p290) target = $region52
        $region51: #{tpu_custom_call.1} parent=43 // pred_region
          %p293 = scmp.lt.s32.totalorder %s18, 1
          %s294 = scalar_select %p293, %s18, 1
          %s295 = smul.addr %s294, 8
          %s296 = scalar_lea.vmem %s1, %s295
        $region52: #{tpu_custom_call.1} parent=43 // pred_fallthru
          _
      $region44: #{tpu_custom_call.1} parent=5 // pred_fallthru
        _
      %p297 = scmp.le.s32.totalorder 1, %s18
      %p298 = scmp.lt.s32.totalorder %s18, 3
      %p299 = pnand %p297, %p298
      %p300 = pneg %p299
      // Predicated region
      $region53: #{tpu_custom_call.1} parent=5 // pred_check
        _
      $region54: #{tpu_custom_call.1} parent=5 // pred_check_branch
        %302 = sbr.rel (%p299) target = $region56
      $region55: #{tpu_custom_call.1} parent=5 // pred_region
        %s303 = ssub.s32 %s18, 1
        %p304 = scmp.lt.s32.totalorder %s23, 1
        %s305 = scalar_select %p304, %s23, 1
        %s306 = smul.addr %s305, 8
        %s307 = scalar_lea.vmem %s0, %s306
        %p308 = pneg %p44
        %p309 = pneg %p41
        %p310 = scmp.lt.s32.totalorder %s23, 1
        %s311 = scalar_select %p310, %s23, 1
        %s312 = smul.addr %s311, 8
        %s313 = scalar_lea.vmem %s1, %s312
        %p314 = pneg %p70
        %p315 = pneg %p67
        %p316 = pneg %p91
        %p317 = pneg %p88
        %p318 = pneg %p112
        %p319 = pneg %p109
        %p320 = pneg %p133
        %p321 = pneg %p130
        %p322 = pneg %p154
        %p323 = pneg %p151
        %p324 = pneg %p175
        %p325 = pneg %p172
        %p326 = pneg %p196
        %p327 = pneg %p193
        %p328 = pneg %p217
        %p329 = pneg %p214
        %p330 = pneg %p243
        %p331 = pneg %p240
        %s332 = sand.u32 %s230, 1
        %s333 = scalar_lea.sflag [#allocation3], %s332
        %s334 = sand.u32 %s230, 1
        %s335 = smul.addr %s334, 8
        %s336 = scalar_lea.vmem [#allocation2], %s335
        %p337 = scmp.lt.s32.totalorder %s23, 1
        %s338 = scalar_select %p337, %s23, 1
        %s339 = smul.addr %s338, 8
        %s340 = scalar_lea.vmem %s0, %s339
        %p341 = scmp.lt.s32.totalorder %s23, 1
        %s342 = scalar_select %p341, %s23, 1
        %s343 = smul.addr %s342, 8
        %s344 = scalar_lea.vmem %s1, %s343
        %v345 = vld [vmem:[%s340] sm:$0xff]
        %v346 = vld [vmem:[%s2] sm:$0xff]
        %v347 = vld [vmem:[%s2 + $0x8] sm:$0xff]
        %v348 = vld [vmem:[%s2 + $0x10] sm:$0xff]
        %v349 = vld [vmem:[%s2 + $0x18] sm:$0xff]
        %v350 = vld [vmem:[%s2 + $0x20] sm:$0xff]
        %v351 = vld [vmem:[%s2 + $0x28] sm:$0xff]
        %v352 = vld [vmem:[%s2 + $0x30] sm:$0xff]
        %v353 = vld [vmem:[%s2 + $0x38] sm:$0xff]
        %vm354 = vcmask 523264
        %v356 = vsel %vm354, %v345, 0
        %358 = vmatprep.subr.mxu0 0.0
        %359 = vmatpush1.msra.mxu0 0.0
        %360 = vmatprep.subr.mxu0 0.0
        %361 = vmatpush1.msra.mxu0 0.0
        %362 = vmatprep.subr.mxu0 0.0
        %363 = vmatpush1.msra.mxu0 0.0
        %364 = vmatprep.subr.mxu0 0.0
        %365 = vmatpush1.msra.mxu0 0.0
        %366 = vmatprep.subr.mxu0 0.0
        %367 = vmatpush1.msra.mxu0 0.0
        %368 = vmatprep.subr.mxu0 0.0
        %369 = vmatpush1.msra.mxu0 0.0
        %370 = vmatprep.subr.mxu0 0.0
        %371 = vmatpush1.msra.mxu0 0.0
        %372 = vmatprep.subr.mxu0 0.0
        %373 = vmatpush1.msra.mxu0 0.0
        %374 = vmatprep.subr.mxu0 0.0
        %375 = vmatpush1.msra.mxu0 %v353
        %376 = vmatprep.subr.mxu0 0.0
        %377 = vmatpush1.msra.mxu0 %v352
        %378 = vmatprep.subr.mxu0 0.0
        %379 = vmatpush1.msra.mxu0 %v351
        %380 = vmatprep.subr.mxu0 0.0
        %381 = vmatpush1.msra.mxu0 %v350
        %382 = vmatprep.subr.mxu0 0.0
        %383 = vmatpush1.msra.mxu0 %v349
        %384 = vmatprep.subr.mxu0 0.0
        %385 = vmatpush1.msra.mxu0 %v348
        %386 = vmatprep.subr.mxu0 0.0
        %387 = vmatpush1.msra.mxu0 %v347
        %388 = vmatprep.subr.mxu0 0.0
        %389 = vmatpush1.msra.mxu0 %v346
        %390 = vmatprep.subr.mxu0 0.0
        %391 = vmatpush2.msra.mxu0 0.0
        %392 = vmatprep.subr.mxu0 0.0
        %393 = vmatpush2.msra.mxu0 0.0
        %394 = vmatprep.subr.mxu0 0.0
        %395 = vmatpush2.msra.mxu0 0.0
        %396 = vmatprep.subr.mxu0 0.0
        %397 = vmatpush2.msra.mxu0 0.0
        %398 = vmatprep.subr.mxu0 0.0
        %399 = vmatpush2.msra.mxu0 0.0
        %400 = vmatprep.subr.mxu0 0.0
        %401 = vmatpush2.msra.mxu0 0.0
        %402 = vmatprep.subr.mxu0 0.0
        %403 = vmatpush2.msra.mxu0 0.0
        %404 = vmatprep.subr.mxu0 0.0
        %405 = vmatpush2.msra.mxu0 0.0
        %406 = vmatprep.subr.mxu0 0.0
        %407 = vmatpush2.msra.mxu0 0.0
        %408 = vmatprep.subr.mxu0 0.0
        %409 = vmatpush2.msra.mxu0 0.0
        %410 = vmatprep.subr.mxu0 0.0
        %411 = vmatpush2.msra.mxu0 0.0
        %412 = vmatprep.subr.mxu0 0.0
        %413 = vmatpush2.msra.mxu0 0.0
        %414 = vmatprep.subr.mxu0 0.0
        %415 = vmatpush2.msra.mxu0 0.0
        %416 = vmatprep.subr.mxu0 0.0
        %417 = vmatpush2.msra.mxu0 0.0
        %418 = vmatprep.subr.mxu0 0.0
        %419 = vmatpush2.msra.mxu0 0.0
        %420 = vmatprep.subr.mxu0 0.0
        %421 = vmatpush2.msra.mxu0 0.0
        %422 = vmatprep.mubr.f32.mxu0 0.0
        %423 = vmatmul.mubr.f32.gmra.mxu0 %v356
        %v424 = vpop.f32.mrf.mxu0
        %v425 = vadd.f32 0.0, %v424
        %v426 = vpop.f32.mrf.mxu0
        %427 = vdwg.mxu0
        %v428 = vld [vmem:[%s3] sm:$0xff]
        %v429 = vld [vmem:[%s3 + $0x8] sm:$0xff]
        %v430 = vld [vmem:[%s3 + $0x10] sm:$0xff]
        %v431 = vld [vmem:[%s3 + $0x18] sm:$0xff]
        %v432 = vld [vmem:[%s4] sm:$0x1]
        %v434 = vlaneseq
        %v435 = vshrl.u32 %v434, 7
        %v436 = vsub.s32 0, %v435
        %v437 = vrot.slane %v432, %v436
        %vm439 = vcmask 261120
        %v441 = vsel %vm439, %v425, 0
        %443 = vmatprep.subr.mxu0 0.0
        %444 = vmatpush1.msra.mxu0 0.0
        %445 = vmatprep.subr.mxu0 0.0
        %446 = vmatpush1.msra.mxu0 0.0
        %447 = vmatprep.subr.mxu0 0.0
        %448 = vmatpush1.msra.mxu0 0.0
        %449 = vmatprep.subr.mxu0 0.0
        %450 = vmatpush1.msra.mxu0 0.0
        %451 = vmatprep.subr.mxu0 0.0
        %452 = vmatpush1.msra.mxu0 0.0
        %453 = vmatprep.subr.mxu0 0.0
        %454 = vmatpush1.msra.mxu0 0.0
        %455 = vmatprep.subr.mxu0 0.0
        %456 = vmatpush1.msra.mxu0 0.0
        %457 = vmatprep.subr.mxu0 0.0
        %458 = vmatpush1.msra.mxu0 0.0
        %459 = vmatprep.subr.mxu0 0.0
        %460 = vmatpush1.msra.mxu0 0.0
        %461 = vmatprep.subr.mxu0 0.0
        %462 = vmatpush1.msra.mxu0 0.0
        %463 = vmatprep.subr.mxu0 0.0
        %464 = vmatpush1.msra.mxu0 0.0
        %465 = vmatprep.subr.mxu0 0.0
        %466 = vmatpush1.msra.mxu0 0.0
        %467 = vmatprep.subr.mxu0 0.0
        %468 = vmatpush1.msra.mxu0 %v431
        %469 = vmatprep.subr.mxu0 0.0
        %470 = vmatpush1.msra.mxu0 %v430
        %471 = vmatprep.subr.mxu0 0.0
        %472 = vmatpush1.msra.mxu0 %v429
        %473 = vmatprep.subr.mxu0 0.0
        %474 = vmatpush1.msra.mxu0 %v428
        %475 = vmatprep.subr.mxu0 0.0
        %476 = vmatpush2.msra.mxu0 0.0
        %477 = vmatprep.subr.mxu0 0.0
        %478 = vmatpush2.msra.mxu0 0.0
        %479 = vmatprep.subr.mxu0 0.0
        %480 = vmatpush2.msra.mxu0 0.0
        %481 = vmatprep.subr.mxu0 0.0
        %482 = vmatpush2.msra.mxu0 0.0
        %483 = vmatprep.subr.mxu0 0.0
        %484 = vmatpush2.msra.mxu0 0.0
        %485 = vmatprep.subr.mxu0 0.0
        %486 = vmatpush2.msra.mxu0 0.0
        %487 = vmatprep.subr.mxu0 0.0
        %488 = vmatpush2.msra.mxu0 0.0
        %489 = vmatprep.subr.mxu0 0.0
        %490 = vmatpush2.msra.mxu0 0.0
        %491 = vmatprep.subr.mxu0 0.0
        %492 = vmatpush2.msra.mxu0 0.0
        %493 = vmatprep.subr.mxu0 0.0
        %494 = vmatpush2.msra.mxu0 0.0
        %495 = vmatprep.subr.mxu0 0.0
        %496 = vmatpush2.msra.mxu0 0.0
        %497 = vmatprep.subr.mxu0 0.0
        %498 = vmatpush2.msra.mxu0 0.0
        %499 = vmatprep.subr.mxu0 0.0
        %500 = vmatpush2.msra.mxu0 0.0
        %501 = vmatprep.subr.mxu0 0.0
        %502 = vmatpush2.msra.mxu0 0.0
        %503 = vmatprep.subr.mxu0 0.0
        %504 = vmatpush2.msra.mxu0 0.0
        %505 = vmatprep.subr.mxu0 0.0
        %506 = vmatpush2.msra.mxu0 0.0
        %507 = vmatprep.mubr.f32.mxu0 0.0
        %508 = vmatmul.mubr.f32.gmra.mxu0 %v441
        %v509 = vpop.f32.mrf.mxu0
        %v510 = vadd.f32 %v437, %v509
        %v511 = vpop.f32.mrf.mxu0
        %512 = vdwg.mxu0
        %v513 = vmax.f32 %v510, 0.0
        %v514 = vld [vmem:[%s5] sm:$0xff]
        %v515 = vld [vmem:[%s5 + $0x8] sm:$0xff]
        %v516 = vld [vmem:[%s5 + $0x10] sm:$0xff]
        %v517 = vld [vmem:[%s5 + $0x18] sm:$0xff]
        %v518 = vld [vmem:[%s5 + $0x20] sm:$0xff]
        %v519 = vld [vmem:[%s5 + $0x28] sm:$0xff]
        %v520 = vld [vmem:[%s5 + $0x30] sm:$0xff]
        %v521 = vld [vmem:[%s5 + $0x38] sm:$0xff]
        %v522 = vld [vmem:[%s5 + $0x40] sm:$0xff]
        %v523 = vld [vmem:[%s5 + $0x48] sm:$0xff]
        %v524 = vld [vmem:[%s5 + $0x50] sm:$0xff]
        %v525 = vld [vmem:[%s5 + $0x58] sm:$0xff]
        %v526 = vld [vmem:[%s5 + $0x60] sm:$0xff]
        %v527 = vld [vmem:[%s5 + $0x68] sm:$0xff]
        %v528 = vld [vmem:[%s5 + $0x70] sm:$0xff]
        %v529 = vld [vmem:[%s5 + $0x78] sm:$0xff]
        %530 = vmatprep.subr.mxu0 0.0
        %531 = vmatpush1.msra.mxu0 %v529
        %532 = vmatprep.subr.mxu0 0.0
        %533 = vmatpush1.msra.mxu0 %v528
        %534 = vmatprep.subr.mxu0 0.0
        %535 = vmatpush1.msra.mxu0 %v527
        %536 = vmatprep.subr.mxu0 0.0
        %537 = vmatpush1.msra.mxu0 %v526
        %538 = vmatprep.subr.mxu0 0.0
        %539 = vmatpush1.msra.mxu0 %v525
        %540 = vmatprep.subr.mxu0 0.0
        %541 = vmatpush1.msra.mxu0 %v524
        %542 = vmatprep.subr.mxu0 0.0
        %543 = vmatpush1.msra.mxu0 %v523
        %544 = vmatprep.subr.mxu0 0.0
        %545 = vmatpush1.msra.mxu0 %v522
        %546 = vmatprep.subr.mxu0 0.0
        %547 = vmatpush1.msra.mxu0 %v521
        %548 = vmatprep.subr.mxu0 0.0
        %549 = vmatpush1.msra.mxu0 %v520
        %550 = vmatprep.subr.mxu0 0.0
        %551 = vmatpush1.msra.mxu0 %v519
        %552 = vmatprep.subr.mxu0 0.0
        %553 = vmatpush1.msra.mxu0 %v518
        %554 = vmatprep.subr.mxu0 0.0
        %555 = vmatpush1.msra.mxu0 %v517
        %556 = vmatprep.subr.mxu0 0.0
        %557 = vmatpush1.msra.mxu0 %v516
        %558 = vmatprep.subr.mxu0 0.0
        %559 = vmatpush1.msra.mxu0 %v515
        %560 = vmatprep.subr.mxu0 0.0
        %561 = vmatpush1.msra.mxu0 %v514
        %562 = vmatprep.subr.mxu0 0.0
        %563 = vmatpush2.msra.mxu0 0.0
        %564 = vmatprep.subr.mxu0 0.0
        %565 = vmatpush2.msra.mxu0 0.0
        %566 = vmatprep.subr.mxu0 0.0
        %567 = vmatpush2.msra.mxu0 0.0
        %568 = vmatprep.subr.mxu0 0.0
        %569 = vmatpush2.msra.mxu0 0.0
        %570 = vmatprep.subr.mxu0 0.0
        %571 = vmatpush2.msra.mxu0 0.0
        %572 = vmatprep.subr.mxu0 0.0
        %573 = vmatpush2.msra.mxu0 0.0
        %574 = vmatprep.subr.mxu0 0.0
        %575 = vmatpush2.msra.mxu0 0.0
        %576 = vmatprep.subr.mxu0 0.0
        %577 = vmatpush2.msra.mxu0 0.0
        %578 = vmatprep.subr.mxu0 0.0
        %579 = vmatpush2.msra.mxu0 0.0
        %580 = vmatprep.subr.mxu0 0.0
        %581 = vmatpush2.msra.mxu0 0.0
        %582 = vmatprep.subr.mxu0 0.0
        %583 = vmatpush2.msra.mxu0 0.0
        %584 = vmatprep.subr.mxu0 0.0
        %585 = vmatpush2.msra.mxu0 0.0
        %586 = vmatprep.subr.mxu0 0.0
        %587 = vmatpush2.msra.mxu0 0.0
        %588 = vmatprep.subr.mxu0 0.0
        %589 = vmatpush2.msra.mxu0 0.0
        %590 = vmatprep.subr.mxu0 0.0
        %591 = vmatpush2.msra.mxu0 0.0
        %592 = vmatprep.subr.mxu0 0.0
        %593 = vmatpush2.msra.mxu0 0.0
        %594 = vmatprep.mubr.f32.mxu0 0.0
        %595 = vmatmul.mubr.f32.gmra.mxu0 %v513
        %v596 = vpop.f32.mrf.mxu0
        %v597 = vadd.f32 0.0, %v596
        %v598 = vpop.f32.mrf.mxu0
        %599 = vdwg.mxu0
        %v600 = vadd.f32 %v425, %v597
        %v601 = vld [vmem:[%s6] sm:$0x1]
        %v603 = vlaneseq
        %v604 = vshrl.u32 %v603, 7
        %v605 = vsub.s32 0, %v604
        %v606 = vrot.slane %v601, %v605
        %v608 = vadd.f32 %v600, %v606
        %v609 = vld [vmem:[%s344] sm:$0xff]
        %v610 = vadd.f32 %v608, %v609
        %v611 = vsel %vm439, %v610, 0.0
        %612 = vadd.xlane.f32.xlu0 %v611
        %v613 = vpop.xlane.xlu0 %612
        %v614 = vrcp.pop 32.0
        %v615 = vmul.f32 %v613, %v614
        %v616 = vmul.f32 %v610, %v610
        %v617 = vsel %vm439, %v616, 0.0
        %618 = vadd.xlane.f32.xlu0 %v617
        %v619 = vpop.xlane.xlu0 %618
        %v620 = vmul.f32 %v619, %v614
        %v621 = vmul.f32 %v615, %v615
        %v622 = vsub.f32 %v620, %v621
        %v623 = vmax.f32 %v622, 0.0
        %v624 = vadd.f32 %v623, 1e-12
        %v625 = vrsqrt.pop %v624
        %v626 = vsub.f32 %v610, %v615
        %v627 = vmul.f32 %v626, %v625
        %v628 = vld [vmem:[%s7] sm:$0x1]
        %v630 = vlaneseq
        %v631 = vshrl.u32 %v630, 7
        %v632 = vsub.s32 0, %v631
        %v633 = vrot.slane %v628, %v632
        %v635 = vmul.f32 %v627, %v633
        %v636 = vld [vmem:[%s8] sm:$0x1]
        %v638 = vlaneseq
        %v639 = vshrl.u32 %v638, 7
        %v640 = vsub.s32 0, %v639
        %v641 = vrot.slane %v636, %v640
        %v643 = vadd.f32 %v635, %v641
        %644 = vst.msk [vmem:[%s336] sm:$0xff] %vm439, %v643
        %s645 = sand.u32 %s230, 1
        %s646 = scalar_lea.sflag [#allocation3], %s645
        %s647 = sand.u32 %s230, 1
        %s648 = smul.addr %s647, 8
        %s649 = scalar_lea.vmem [#allocation2], %s648
        // Predicated region
        $region57: #{tpu_custom_call.1} parent=55 // pred_check
          %p650 = pneg %p240
        $region58: #{tpu_custom_call.1} parent=55 // pred_check_branch
          %652 = sbr.rel (%p650) target = $region60
        $region59: #{tpu_custom_call.1} parent=55 // pred_region
          %s654 = ssub.s32 128, 128
          %655 = vsyncadd %s646, %s654
          %s656 = smul.addr %s23, 128
          %s657 = scalar_lea.hbm %s9, %s656
          %s659 = sshll.u32 %s649, 4
          %s660 = int_to_ptr.vmem [resolvable:$true] %s659
          %662 = dma.vmem_to_hbm [thread:$0]  %s660, 128, %s657, %s646
        $region60: #{tpu_custom_call.1} parent=55 // pred_fallthru
          _
      $region56: #{tpu_custom_call.1} parent=5 // pred_fallthru
        _
      %p663 = scmp.le.s32.totalorder 2, %s18
      // Predicated region
      $region61: #{tpu_custom_call.1} parent=5 // pred_check
        %p664 = pneg %p663
      $region62: #{tpu_custom_call.1} parent=5 // pred_check_branch
        %666 = sbr.rel (%p664) target = $region64
      $region63: #{tpu_custom_call.1} parent=5 // pred_region
        %s667 = ssub.s32 %s18, 2
        // Predicated region
        $region65: #{tpu_custom_call.1} parent=63 // pred_check
          %p668 = pneg %p246
        $region66: #{tpu_custom_call.1} parent=63 // pred_check_branch
          %670 = sbr.rel (%p668) target = $region68
        $region67: #{tpu_custom_call.1} parent=63 // pred_region
          %s671 = sand.u32 %s231, 1
          %s672 = scalar_lea.sflag [#allocation3], %s671
          %s673 = sand.u32 %s231, 1
          %s674 = smul.addr %s673, 8
          %s675 = scalar_lea.vmem [#allocation2], %s674
          %676 = dma.done %s672, 128
        $region68: #{tpu_custom_call.1} parent=63 // pred_fallthru
          _
      $region64: #{tpu_custom_call.1} parent=5 // pred_fallthru
        _
    $region6: #{tpu_custom_call.1} parent=1 // loop_footer
      %s22 = sadd.s32 1, %s18
    $region7: #{tpu_custom_call.1} parent=1 // loop_footer_branch
      %17 = sbr.rel target = $region3
    $region8: #{tpu_custom_call.1} parent=1 // loop_exit
      _
    %677 = vsyncpa [#allocation3], 1
    %s678 = scalar_lea.sflag [#allocation3], 1
    %679 = vsyncpa %s678, 1

</llo_original>
